<compile_context>
chip_gen: v7x
topology: tpu7x:2x2x1
jax: 0.10.0
libtpu: 0.0.40
codegen_flags: <defaults>
</compile_context>

<pallas_src>
import jax
import jax.numpy as jnp
from jax.experimental import pallas as pl
from jax.experimental.pallas import tpu as pltpu


def _logreg_kernel(x_ref, w_ref, b_ref, o_ref):
    # x_ref: (TB, F) VMEM tile, w_ref: (F, 1) VMEM (resident),
    # b_ref: (1,) SMEM scalar bias, o_ref: (1, TB) VMEM (lane-dense).
    logits = jnp.dot(x_ref[...], w_ref[...],
                     preferred_element_type=jnp.float32) + b_ref[0]   # MXU matvec
    logits = logits.reshape(1, -1)   # (TB,1)->(1,TB): single relayout -> lane-dense store
    # Exact sigmoid: exp(-z)->inf for very negative z gives 1/(1+inf)=0 (no NaN).
    y = 1.0 / (1.0 + jnp.exp(-logits))
    o_ref[...] = y.astype(o_ref.dtype)


def _round_up(v, m):
    return ((v + m - 1) // m) * m


def _choose_batch_tile(B, F, itemsize,
                       target_bytes=2 * 1024 * 1024,
                       budget_bytes=20 * 1024 * 1024):
    """Batch tile sized by HBM bytes-per-step, bounded by the double-buffered VMEM budget.

    F < 128 is lane-padded in VMEM, so the footprint math uses round_up(F, 128).
    """
    f_pad = _round_up(F, 128)
    row_bytes = f_pad * itemsize
    cap = max(8, ((budget_bytes // (2 * row_bytes)) // 8) * 8)   # VMEM double-buffer cap
    tb = max(1024, target_bytes // row_bytes)                    # >= ~2 MiB HBM per step
    tb = min(tb, cap)
    tb = max(8, (tb // 8) * 8)
    return min(tb, _round_up(B, 8))


def logistic_regression_forward(x, w, b, *, tb=None):
    """x: [B, F], w: [F], b: scalar  ->  sigmoid(x @ w + b): [B]."""
    B, F = x.shape
    dtype = x.dtype
    itemsize = jnp.dtype(dtype).itemsize

    if tb is None:
        tb = _choose_batch_tile(B, F, itemsize)
    tb = max(8, (int(tb) // 8) * 8)
    num_tiles = -(-B // tb)
    if num_tiles > 1 and tb % 128 != 0:
        # Multi-tile lane-dense output wants a 128-multiple tile (minor-dim rule).
        tb = _round_up(tb, 128)
        num_tiles = -(-B // tb)

    w_col = jnp.reshape(w.astype(dtype), (F, 1))        # (F, 1) column for the MXU dot
    b_vec = jnp.reshape(jnp.asarray(b, dtype), (1,))    # scalar bias for SMEM

    out = pl.pallas_call(
        _logreg_kernel,
        out_shape=jax.ShapeDtypeStruct((1, num_tiles * tb), dtype),
        grid_spec=pltpu.PrefetchScalarGridSpec(
            num_scalar_prefetch=0,
            grid=(num_tiles,),
            in_specs=[
                pl.BlockSpec((tb, F), lambda i: (i, 0)),   # streamed x tiles (double-buffered)
                pl.BlockSpec((F, 1), lambda i: (0, 0)),    # resident weight column
                pl.BlockSpec(memory_space=pltpu.SMEM),     # bias
            ],
            out_specs=pl.BlockSpec((1, tb), lambda i: (0, i)),   # lane-dense output row
        ),
        compiler_params=pltpu.CompilerParams(
            dimension_semantics=("parallel",),             # lets v7x use both TCs
            vmem_limit_bytes=32 * 1024 * 1024,             # safe on v5e/v6e/v7x
        ),
    )(x, w_col, b_vec)

    # squeeze(-1) as in the PyTorch forward; drop rows from the partial last tile.
    return out[0, :B]


if __name__ == "__main__":
    key = jax.random.PRNGKey(0)
    kx, kw, kb = jax.random.split(key, 3)

    B, n_features = 8, 32  # small shapes consistent with the module

    x = jax.random.normal(kx, (B, n_features), dtype=jnp.float32)

    # Deterministic parameter init mimicking nn.Linear: U(-1/sqrt(F), 1/sqrt(F))
    bound = 1.0 / jnp.sqrt(jnp.float32(n_features))
    w = jax.random.uniform(kw, (n_features,), jnp.float32, -bound, bound)
    b = jax.random.uniform(kb, (), jnp.float32, -bound, bound)

    y = logistic_regression_forward(x, w, b)
    jax.block_until_ready(y)

    y_ref = jax.nn.sigmoid(x @ w + b)
    assert y.shape == (B,)
    assert jnp.allclose(y, y_ref, atol=1e-4), (y, y_ref)

    # Multi-tile, ragged-batch path: grid > 1, partial last x block, no wrapper pad.
    B2 = 500
    x2 = jax.random.normal(jax.random.PRNGKey(1), (B2, n_features), dtype=jnp.float32)
    y2 = logistic_regression_forward(x2, w, b, tb=128)
    jax.block_until_ready(y2)
    y2_ref = jax.nn.sigmoid(x2 @ w + b)
    assert y2.shape == (B2,)
    assert jnp.allclose(y2, y2_ref, atol=1e-4), (y2, y2_ref)

    print("KERNEL_OK")
</pallas_src>

<mosaic_0001>
module attributes {stable_mosaic.version = 11 : i64} {
  func.func @_logreg_kernel(%arg0: i32, %arg1: memref<8x32xf32, #tpu.memory_space<vmem>>, %arg2: memref<32x1xf32, #tpu.memory_space<vmem>>, %arg3: memref<1xf32, #tpu.memory_space<smem>>, %arg4: memref<1x8xf32, #tpu.memory_space<vmem>>) attributes {dimension_semantics = [#tpu.dimension_semantics<parallel>], iteration_bounds = array<i64: 1>, scalar_prefetch = 0 : i64, scratch_operands = 0 : i64, tpu.core_type = #tpu.core_type<tc>, window_params = [{transform_indices = @transform_0, window_bounds = array<i64: 8, 32>}, {pipeline_mode = #tpu.pipeline_mode<synchronous>, transform_indices = @transform_1, window_bounds = array<i64: 32, 1>}, {transform_indices = @transform_2, window_bounds = array<i64: 1>}, {transform_indices = @transform_3, window_bounds = array<i64: 1, 8>}]} {
    %c0 = arith.constant 0 : index
    %c0_0 = arith.constant 0 : index
    %0 = vector.load %arg1[%c0, %c0_0] : memref<8x32xf32, #tpu.memory_space<vmem>>, vector<8x32xf32>
    %c0_1 = arith.constant 0 : index
    %c0_2 = arith.constant 0 : index
    %1 = vector.load %arg2[%c0_1, %c0_2] : memref<32x1xf32, #tpu.memory_space<vmem>>, vector<32x1xf32>
    %cst = arith.constant dense<0.000000e+00> : vector<8x1xf32>
    %2 = tpu.matmul %0, %1, %cst {dimension_numbers = #tpu.dot_dimension_numbers<[1], [0], [0], [1], [0, 0, 1, 1], [], []>} : vector<8x32xf32>, vector<32x1xf32>, vector<8x1xf32> -> vector<8x1xf32>
    %c0_3 = arith.constant 0 : index
    %3 = memref.load %arg3[%c0_3] : memref<1xf32, #tpu.memory_space<smem>>
    %4 = vector.broadcast %3 : f32 to vector<8x1xf32>
    %5 = arith.addf %2, %4 : vector<8x1xf32>
    %6 = vector.shape_cast %5 : vector<8x1xf32> to vector<1x8xf32>
    %cst_4 = arith.constant 0.000000e+00 : f32
    %7 = vector.broadcast %cst_4 : f32 to vector<1x8xf32>
    %8 = arith.subf %7, %6 : vector<1x8xf32>
    %9 = math.exp %8 : vector<1x8xf32>
    %cst_5 = arith.constant 1.000000e+00 : f32
    %10 = vector.broadcast %cst_5 : f32 to vector<1x8xf32>
    %11 = arith.addf %10, %9 : vector<1x8xf32>
    %cst_6 = arith.constant 1.000000e+00 : f32
    %12 = vector.broadcast %cst_6 : f32 to vector<1x8xf32>
    %13 = arith.divf %12, %11 : vector<1x8xf32>
    %c0_7 = arith.constant 0 : index
    %c0_8 = arith.constant 0 : index
    %14 = vector.load %arg4[%c0_7, %c0_8] : memref<1x8xf32, #tpu.memory_space<vmem>>, vector<1x8xf32>
    tpu.vector_store %arg4[%c0_7, %c0_8], %13 {strides = array<i32>} : memref<1x8xf32, #tpu.memory_space<vmem>>, vector<1x8xf32>,
    return
  }
  func.func @transform_0(%arg0: i32) -> (i32, i32) {
    %c0_i32 = arith.constant 0 : i32
    %c0_i32_0 = arith.constant 0 : i32
    return %arg0, %c0_i32 : i32, i32
  }
  func.func @transform_1(%arg0: i32) -> (i32, i32) {
    %c0_i32 = arith.constant 0 : i32
    %c0_i32_0 = arith.constant 0 : i32
    %c0_i32_1 = arith.constant 0 : i32
    return %c0_i32, %c0_i32_0 : i32, i32
  }
  func.func @transform_2(%arg0: i32) -> i32 {
    %c0_i32 = arith.constant 0 : i32
    %c0_i32_0 = arith.constant 0 : i32
    return %c0_i32 : i32
  }
  func.func @transform_3(%arg0: i32) -> (i32, i32) {
    %c0_i32 = arith.constant 0 : i32
    %c0_i32_0 = arith.constant 0 : i32
    return %c0_i32, %arg0 : i32, i32
  }
}

</mosaic_0001>

<llo_original>
// kernel: tpu_custom_call.1
$region0: #{tpu_custom_call.1}
  #allocation0 [shape = 'u32[]', space=smem, size = 0x4, offset = 0x4, fixed_abs, tag = 'smem constant byte address 0x4 - core index']
  #allocation1 [shape = 'u32[144,128]{1,0:T(1,128)}', space=vmem, size = 0x12000, scoped, tag = 'internal scratch']
  #allocation2 [shape = 'f32[1]{0:T(128)S(6)}', space=smem, size = 0x200, scoped, tag = 'scoped memory for tpu_custom_call.1']
  %s0 = inlined_call_operand.vmem [shape: f32[8,32], index: 0, kind: input, shape index: {}]
  %s1 = inlined_call_operand.vmem [shape: f32[32,1], index: 1, kind: input, shape index: {}]
  %s2 = inlined_call_operand.<no memory space> [shape: f32[1], index: 2, kind: input, shape index: {}]
  %s3 = inlined_call_operand.hbm [shape: f32[1,8], index: 3, kind: output, shape index: {}]
  %s4 = sld [smem:[#allocation0]]
  $region22: #{tpu_custom_call.1} parent=0
    _
  %s6 = ssub.s32 1, %s4
  %s7 = scalar_select 0, %s6, %s4
  %8 = sst [smem:[#allocation2]] %s2
  $region1: #{tpu_custom_call.1} parent=0
    #allocation3 [shape = 'u8[512]{0}', space=vmem, size = 0x400, scoped, tag = 'output window, operand 0, single buffered']
    #allocation4 [shape = 's32[1]{0}', space=sflag, size = 0x4, scoped, tag = 'scoped memory for tpu_custom_call.1']
    %9 = vsyncpa [#allocation4], 0
    // Predicated region
    $region2: #{tpu_custom_call.1} parent=1 // pred_check
      _
    $region3: #{tpu_custom_call.1} parent=1 // pred_check_branch
      %11 = sbr.rel (0) target = $region5
    $region4: #{tpu_custom_call.1} parent=1 // pred_region
      _
    $region5: #{tpu_custom_call.1} parent=1 // pred_fallthru
      _
    // Predicated region
    $region6: #{tpu_custom_call.1} parent=1 // pred_check
      _
    $region7: #{tpu_custom_call.1} parent=1 // pred_check_branch
      %13 = sbr.rel (0) target = $region9
    $region8: #{tpu_custom_call.1} parent=1 // pred_region
      _
    $region9: #{tpu_custom_call.1} parent=1 // pred_fallthru
      _
    // Predicated region
    $region10: #{tpu_custom_call.1} parent=1 // pred_check
      _
    $region11: #{tpu_custom_call.1} parent=1 // pred_check_branch
      %15 = sbr.rel (0) target = $region13
    $region12: #{tpu_custom_call.1} parent=1 // pred_region
      _
    $region13: #{tpu_custom_call.1} parent=1 // pred_fallthru
      _
    %v16 = vld [vmem:[%s0] sm:$0xff]
    %v17 = vld [vmem:[%s1] sm:$0xff]
    %v18 = vld [vmem:[%s1 + $0x8] sm:$0xff]
    %v19 = vld [vmem:[%s1 + $0x10] sm:$0xff]
    %v20 = vld [vmem:[%s1 + $0x18] sm:$0xff]
    %s21 = sld [smem:[#allocation2]]
    %v22 = vstv %s21
    %vm23 = vcmask 261120
    %v25 = vsel %vm23, %v16, 0
    %27 = vmatprep.subr.mxu0 0.0
    %28 = vmatpush1.msra.mxu0 %v17
    %29 = vmatprep.subr.mxu0 0.0
    %30 = vmatpush1.msra.mxu0 %v18
    %31 = vmatprep.subr.mxu0 0.0
    %32 = vmatpush1.msra.mxu0 %v19
    %33 = vmatprep.subr.mxu0 0.0
    %34 = vmatpush1.msra.mxu0 %v20
    %35 = vmatprep.subr.mxu0 0.0
    %36 = vmatpush1.msra.mxu0 0.0
    %37 = vmatprep.subr.mxu0 0.0
    %38 = vmatpush1.msra.mxu0 0.0
    %39 = vmatprep.subr.mxu0 0.0
    %40 = vmatpush1.msra.mxu0 0.0
    %41 = vmatprep.subr.mxu0 0.0
    %42 = vmatpush1.msra.mxu0 0.0
    %43 = vmatprep.subr.mxu0 0.0
    %44 = vmatpush1.msra.mxu0 0.0
    %45 = vmatprep.subr.mxu0 0.0
    %46 = vmatpush1.msra.mxu0 0.0
    %47 = vmatprep.subr.mxu0 0.0
    %48 = vmatpush1.msra.mxu0 0.0
    %49 = vmatprep.subr.mxu0 0.0
    %50 = vmatpush1.msra.mxu0 0.0
    %51 = vmatprep.subr.mxu0 0.0
    %52 = vmatpush1.msra.mxu0 0.0
    %53 = vmatprep.subr.mxu0 0.0
    %54 = vmatpush1.msra.mxu0 0.0
    %55 = vmatprep.subr.mxu0 0.0
    %56 = vmatpush1.msra.mxu0 0.0
    %57 = vmatprep.subr.mxu0 0.0
    %58 = vmatpush1.msra.mxu0 0.0
    %59 = vmatprep.subr.mxu0 0.0
    %60 = vmatpush1.msra.mxu0 0.0
    %61 = vmatprep.subr.mxu0 0.0
    %62 = vmatpush1.msra.mxu0 0.0
    %63 = vmatprep.subr.mxu0 0.0
    %64 = vmatpush1.msra.mxu0 0.0
    %65 = vmatprep.subr.mxu0 0.0
    %66 = vmatpush1.msra.mxu0 0.0
    %67 = vmatprep.subr.mxu0 0.0
    %68 = vmatpush1.msra.mxu0 0.0
    %69 = vmatprep.subr.mxu0 0.0
    %70 = vmatpush1.msra.mxu0 0.0
    %71 = vmatprep.subr.mxu0 0.0
    %72 = vmatpush1.msra.mxu0 0.0
    %73 = vmatprep.subr.mxu0 0.0
    %74 = vmatpush1.msra.mxu0 0.0
    %75 = vmatprep.subr.mxu0 0.0
    %76 = vmatpush1.msra.mxu0 0.0
    %77 = vmatprep.subr.mxu0 0.0
    %78 = vmatpush1.msra.mxu0 0.0
    %79 = vmatprep.subr.mxu0 0.0
    %80 = vmatpush1.msra.mxu0 0.0
    %81 = vmatprep.subr.mxu0 0.0
    %82 = vmatpush1.msra.mxu0 0.0
    %83 = vmatprep.subr.mxu0 0.0
    %84 = vmatpush1.msra.mxu0 0.0
    %85 = vmatprep.subr.mxu0 0.0
    %86 = vmatpush1.msra.mxu0 0.0
    %87 = vmatprep.subr.mxu0 0.0
    %88 = vmatpush1.msra.mxu0 0.0
    %89 = vmatprep.subr.mxu0 0.0
    %90 = vmatpush1.msra.mxu0 0.0
    %91 = vmatprep.mubr.f32.mxu0 0.0
    %92 = vmatmul.mubr.f32.gmra.mrb[0].mxu0 %v25
    %v93 = vpop.f32.mrb[0].mxu0
    %v94 = vadd.f32 %v22, %v93
    %v95 = vpop.f32.mrb[0].mxu0
    %96 = vdwg.mxu0
    %v97 = vsub.f32 0.0, %v94
    %v98 = vmul.f32 %v97, 1.442695
    %v99 = vpow.pop %v98
    %v100 = vadd.f32 %v99, 1.0
    %v101 = vrcp.pop %v100
    %v102 = vmul.f32 1.0, %v101
    %104 = vset.pattern.permute.xlu0 0
    %105 = vperm.xlu0 %104, %v102
    %v106 = vpop.permute.xlu0 %105
    %v107 = vlaneseq
    %v108 = vand.u32 %v107, 127
    %v109 = vlaneseq
    %v110 = vshrl.u32 %v109, 7
    %v111 = vsub.s32 %v108, %v110
    %v112 = vrot.slane %v106, %v111
    %vm114 = vcmask 57344
    %115 = vst.msk [vmem:[#allocation3] sm:$0x1] %vm114, %v112
    // Predicated region
    $region14: #{tpu_custom_call.1} parent=1 // pred_check
      _
    $region15: #{tpu_custom_call.1} parent=1 // pred_check_branch
      %117 = sbr.rel (0) target = $region17
    $region16: #{tpu_custom_call.1} parent=1 // pred_region
      %s119 = ssub.s32 16, 16
      %120 = vsyncadd [#allocation4], %s119
      %s122 = sshll.u32 [#allocation3], 4
      %s123 = int_to_ptr.vmem [resolvable:$true] %s122
      %125 = dma.vmem_to_hbm [thread:$0]  %s123, 16, %s3, [#allocation4]
    $region17: #{tpu_custom_call.1} parent=1 // pred_fallthru
      _
    // Predicated region
    $region18: #{tpu_custom_call.1} parent=1 // pred_check
      _
    $region19: #{tpu_custom_call.1} parent=1 // pred_check_branch
      %127 = sbr.rel (0) target = $region21
    $region20: #{tpu_custom_call.1} parent=1 // pred_region
      %128 = dma.done [#allocation4], 16
    $region21: #{tpu_custom_call.1} parent=1 // pred_fallthru
      _
    %129 = vsyncpa [#allocation4], 1

</llo_original>
